<compile_context>
chip_gen: v7x
topology: tpu7x:2x2x1
jax: 0.10.0
libtpu: 0.0.40
codegen_flags: <defaults>
</compile_context>

<pallas_src>
import functools

import jax
import jax.numpy as jnp
from jax import lax
from jax.experimental import pallas as pl
from jax.experimental.pallas import tpu as pltpu


def _round_up(x: int, m: int) -> int:
    return ((x + m - 1) // m) * m


def _vmem_capacity_bytes() -> int:
    """Physical VMEM per TensorCore; conservative fallback = v7x (64 MiB)."""
    try:
        cap = getattr(pltpu.get_tpu_info(), "vmem_capacity_bytes", None)
        if cap:
            return int(cap)
    except Exception:
        pass
    return 64 * 1024 * 1024


def _exp_in_bf16() -> bool:
    """bf16 EUP exp path exists on v6e/v7x; keep f32 on v5e and older."""
    try:
        kind = jax.devices()[0].device_kind.lower()
        return any(tag in kind for tag in ("v6", "v7", "7x"))
    except Exception:
        return False


# -----------------------------------------------------------------------------
# kernel
# -----------------------------------------------------------------------------
def mlp_head_kernel(x_ref, w_ref, b_ref, o_ref, *scratch, num_classes, exp_bf16):
    """Grid = (batch tiles i [parallel], D-reduction tiles k [arbitrary]).

    x_ref: (tm, tk) bf16        w_ref: (tk, C_p) bf16  (prepared [D_p, C_p])
    b_ref: (1, C_p)  f32        o_ref: (tm, C_p) out dtype
    scratch: optional (tm, C_p) f32 accumulator; when the output dtype is f32
             the output block itself (resident across k) is the accumulator.
    """
    acc_ref = scratch[0] if scratch else o_ref
    k = pl.program_id(1)

    @pl.when(k == 0)
    def _init():
        # Fold the bias into the accumulator init (saves an epilogue add).
        acc_ref[...] = jnp.broadcast_to(b_ref[...], acc_ref.shape)

    # logits += x_tile @ w_tile on the MXU (bf16 in, f32 accumulate).
    acc_ref[...] += jnp.dot(x_ref[...], w_ref[...],
                            preferred_element_type=jnp.float32)

    @pl.when(k == pl.num_programs(1) - 1)
    def _finalize():
        logits = acc_ref[...]
        if logits.shape[-1] != num_classes:
            # Mask padded class lanes to -inf so the softmax ignores them.
            lane = lax.broadcasted_iota(jnp.int32, logits.shape, 1)
            logits = jnp.where(lane < num_classes, logits, -jnp.inf)
        m = jnp.max(logits, axis=-1, keepdims=True)
        z = logits - m
        if exp_bf16:
            # v6e/v7x: bf16 EUP exp (~2x transcendental rate); f32 denominator.
            e = jnp.exp(z.astype(jnp.bfloat16)).astype(jnp.float32)
        else:
            e = jnp.exp(z)
        denom = jnp.sum(e, axis=-1, keepdims=True)
        probs = e * pl.reciprocal(denom, approx=True)
        o_ref[...] = probs.astype(o_ref.dtype)


# -----------------------------------------------------------------------------
# wrapper
# -----------------------------------------------------------------------------
def prepare_params(w, b):
    """One-time parameter prep (in a real model this happens at init, not per
    forward call): bf16 cast, pad class axis and D to multiples of 128, and
    transpose to [D_p, C_p] so weight DMA tiles are lane-dense."""
    C, D = w.shape
    C_p = _round_up(C, 128)
    D_p = _round_up(D, 128)
    w_p = jnp.zeros((D_p, C_p), jnp.bfloat16).at[:D, :C].set(
        w.astype(jnp.bfloat16).T)
    b_p = jnp.zeros((1, C_p), jnp.float32).at[:, :C].set(
        b.astype(jnp.float32)[None, :])
    return w_p, b_p


def _select_tiles(B, D_p, C_p, out_bytes, acc_in_out, vmem_budget):
    def usage(tm, tk):
        u = 2 * tk * C_p * 2            # weight tiles (bf16, double-buffered)
        u += 2 * tm * tk * 2            # x tiles (bf16, double-buffered)
        u += 2 * tm * C_p * out_bytes   # output tiles (double-buffered)
        u += 2 * C_p * 4                # bias
        if not acc_in_out:
            u += tm * C_p * 4           # f32 accumulator scratch
        return u

    # Batch tile: multiple of 8; capped at 512 (keeps the streamed-weight case
    # above the v6e HBM/MXU balance); ensure >= 2 batch tiles when possible so
    # both v7x TensorCores get work on the "parallel" axis.
    if B < 8:
        tm = B                          # full-dim block (legal when == array dim)
    else:
        tm = min(_round_up(B, 8), 512)
        if pl.cdiv(B, tm) < 2 and B > 8:
            tm = max(8, _round_up(-(-B // 2), 8))

    while True:
        # Prefer a fully VMEM-resident weight: tk = D_p makes the weight block
        # index constant, so the whole weight is DMA'd from HBM exactly once.
        if usage(tm, D_p) <= vmem_budget:
            return tm, D_p
        for tk in (512, 256, 128):
            if D_p % tk == 0 and usage(tm, tk) <= vmem_budget:
                return tm, tk
        if tm > 8:
            tm = _round_up(max(8, tm // 2), 8)
        else:
            return tm, 128              # minimal tiles; last resort


def mlp_head(x, w_p, b_p, num_classes):
    """x: [B, D] float; w_p: [D_p, C_p] bf16 (prepared); b_p: [1, C_p] f32."""
    B, D = x.shape
    D_p, C_p = w_p.shape
    out_dtype = x.dtype
    out_bytes = jnp.dtype(out_dtype).itemsize
    # Accumulate directly in the resident output block when it is f32.
    acc_in_out = out_dtype == jnp.float32

    vmem_budget = int(_vmem_capacity_bytes() * 0.75)  # ~48MiB v7x / ~96MiB v5e,v6e
    tm, tk = _select_tiles(B, D_p, C_p, out_bytes, acc_in_out, vmem_budget)

    # Activation glue: bf16 cast; zero-pad D -> D_p only when unaligned
    # (restores (.,128) lane tiling).  No batch padding (partial edge tile).
    x_bf = x.astype(jnp.bfloat16)
    if D_p != D:
        x_bf = jnp.pad(x_bf, ((0, 0), (0, D_p - D)))

    grid = (pl.cdiv(B, tm), D_p // tk)
    scratch = [] if acc_in_out else [pltpu.VMEM((tm, C_p), jnp.float32)]

    out_padded = pl.pallas_call(
        functools.partial(mlp_head_kernel, num_classes=num_classes,
                          exp_bf16=_exp_in_bf16()),
        out_shape=jax.ShapeDtypeStruct((B, C_p), out_dtype),
        grid=grid,
        in_specs=[
            pl.BlockSpec((tm, tk), lambda i, k: (i, k)),    # x    [B,  D_p]
            pl.BlockSpec((tk, C_p), lambda i, k: (k, 0)),   # w    [D_p, C_p]
            pl.BlockSpec((1, C_p), lambda i, k: (0, 0)),    # bias [1,  C_p]
        ],
        out_specs=pl.BlockSpec((tm, C_p), lambda i, k: (i, 0)),
        scratch_shapes=scratch,
        compiler_params=pltpu.CompilerParams(
            dimension_semantics=("parallel", "arbitrary"),
            vmem_limit_bytes=vmem_budget,
        ),
    )(x_bf, w_p, b_p)

    # strip class padding
    return out_padded[:, :num_classes]


if __name__ == "__main__":
    # shapes implied by the module: args.dsize=32, args.num_classes=16, batch=8
    B, D, C = 8, 32, 16

    key = jax.random.PRNGKey(0)
    kx, kw, kb = jax.random.split(key, 3)

    x = jax.random.normal(kx, (B, D), dtype=jnp.float32)
    # nn.Linear parameter shapes: weight [C, D], bias [C]
    w = jax.random.normal(kw, (C, D), dtype=jnp.float32) * 0.05
    b = jax.random.normal(kb, (C,), dtype=jnp.float32) * 0.05

    w_p, b_p = prepare_params(w, b)          # one-time (init-time) work
    out = mlp_head(x, w_p, b_p, num_classes=C)
    out = jax.block_until_ready(out)

    # sanity check vs plain-JAX reference (bf16 matmul + approx rcp => loose tol)
    ref = jax.nn.softmax(x @ w.T + b, axis=-1)
    assert out.shape == (B, C)
    assert jnp.allclose(out, ref, atol=2e-2, rtol=2e-2)
    assert jnp.allclose(jnp.sum(out, axis=-1), 1.0, atol=5e-3)

    print("KERNEL_OK")
</pallas_src>

<mosaic_0001>
module attributes {stable_mosaic.version = 11 : i64} {
  func.func @mlp_head_kernel(%arg0: i32, %arg1: i32, %arg2: memref<8x128xbf16, #tpu.memory_space<vmem>>, %arg3: memref<128x128xbf16, #tpu.memory_space<vmem>>, %arg4: memref<1x128xf32, #tpu.memory_space<vmem>>, %arg5: memref<8x128xf32, #tpu.memory_space<vmem>>) attributes {dimension_semantics = [#tpu.dimension_semantics<parallel>, #tpu.dimension_semantics<arbitrary>], iteration_bounds = array<i64: 1, 1>, scalar_prefetch = 0 : i64, scratch_operands = 0 : i64, tpu.core_type = #tpu.core_type<tc>, window_params = [{transform_indices = @transform_0, window_bounds = array<i64: 8, 128>}, {transform_indices = @transform_1, window_bounds = array<i64: 128, 128>}, {pipeline_mode = #tpu.pipeline_mode<synchronous>, transform_indices = @transform_2, window_bounds = array<i64: 1, 128>}, {transform_indices = @transform_3, window_bounds = array<i64: 8, 128>}]} {
    %c0_i32 = arith.constant 0 : i32
    %0 = arith.cmpi eq, %arg1, %c0_i32 : i32
    %1 = arith.extui %0 : i1 to i32
    %c0_i32_0 = arith.constant 0 : i32
    %2 = arith.cmpi ne, %1, %c0_i32_0 : i32
    scf.if %2 {
      %c0_10 = arith.constant 0 : index
      %c0_11 = arith.constant 0 : index
      %12 = vector.load %arg4[%c0_10, %c0_11] : memref<1x128xf32, #tpu.memory_space<vmem>>, vector<1x128xf32>
      %13 = vector.shape_cast %12 : vector<1x128xf32> to vector<1x128xf32>
      %14 = vector.broadcast %13 : vector<1x128xf32> to vector<8x128xf32>
      %c0_12 = arith.constant 0 : index
      %c0_13 = arith.constant 0 : index
      %15 = vector.load %arg5[%c0_12, %c0_13] : memref<8x128xf32, #tpu.memory_space<vmem>>, vector<8x128xf32>
      tpu.vector_store %arg5[%c0_12, %c0_13], %14 {strides = array<i32>} : memref<8x128xf32, #tpu.memory_space<vmem>>, vector<8x128xf32>,
    } else {
    }
    %c0 = arith.constant 0 : index
    %c0_1 = arith.constant 0 : index
    %3 = vector.load %arg5[%c0, %c0_1] : memref<8x128xf32, #tpu.memory_space<vmem>>, vector<8x128xf32>
    %c0_2 = arith.constant 0 : index
    %c0_3 = arith.constant 0 : index
    %4 = vector.load %arg2[%c0_2, %c0_3] : memref<8x128xbf16, #tpu.memory_space<vmem>>, vector<8x128xbf16>
    %c0_4 = arith.constant 0 : index
    %c0_5 = arith.constant 0 : index
    %5 = vector.load %arg3[%c0_4, %c0_5] : memref<128x128xbf16, #tpu.memory_space<vmem>>, vector<128x128xbf16>
    %cst = arith.constant dense<0.000000e+00> : vector<8x128xf32>
    %6 = tpu.matmul %4, %5, %cst {dimension_numbers = #tpu.dot_dimension_numbers<[1], [0], [0], [1], [0, 0, 1, 1], [], []>} : vector<8x128xbf16>, vector<128x128xbf16>, vector<8x128xf32> -> vector<8x128xf32>
    %7 = arith.addf %3, %6 : vector<8x128xf32>
    %c0_6 = arith.constant 0 : index
    %c0_7 = arith.constant 0 : index
    %8 = vector.load %arg5[%c0_6, %c0_7] : memref<8x128xf32, #tpu.memory_space<vmem>>, vector<8x128xf32>
    tpu.vector_store %arg5[%c0_6, %c0_7], %7 {strides = array<i32>} : memref<8x128xf32, #tpu.memory_space<vmem>>, vector<8x128xf32>,
    %c0_i32_8 = arith.constant 0 : i32
    %9 = arith.cmpi eq, %arg1, %c0_i32_8 : i32
    %10 = arith.extui %9 : i1 to i32
    %c0_i32_9 = arith.constant 0 : i32
    %11 = arith.cmpi ne, %10, %c0_i32_9 : i32
    scf.if %11 {
      %c0_10 = arith.constant 0 : index
      %c0_11 = arith.constant 0 : index
      %12 = vector.load %arg5[%c0_10, %c0_11] : memref<8x128xf32, #tpu.memory_space<vmem>>, vector<8x128xf32>
      %13 = tpu.iota {dimensions = array<i32: 1>} : vector<8x128xi32>
      %c16_i32 = arith.constant 16 : i32
      %14 = vector.broadcast %c16_i32 : i32 to vector<8x128xi32>
      %15 = arith.cmpi slt, %13, %14 : vector<8x128xi32>
      %cst_12 = arith.constant 0xFF800000 : f32
      %16 = vector.broadcast %cst_12 : f32 to vector<8x128xf32>
      %17 = arith.select %15, %12, %16 : vector<8x128xi1>, vector<8x128xf32>
      %cst_13 = arith.constant dense<0xFF800000> : vector<8xf32>
      %18 = vector.multi_reduction <maximumf>, %17, %cst_13 [1] : vector<8x128xf32> to vector<8xf32>
      %19 = vector.shape_cast %18 : vector<8xf32> to vector<8x1xf32>
      %20 = vector.broadcast %19 : vector<8x1xf32> to vector<8x128xf32>
      %21 = arith.subf %17, %20 : vector<8x128xf32>
      %22 = math.exp %21 : vector<8x128xf32>
      %cst_14 = arith.constant dense<0.000000e+00> : vector<8xf32>
      %23 = vector.multi_reduction <add>, %22, %cst_14 [1] : vector<8x128xf32> to vector<8xf32>
      %24 = vector.shape_cast %23 : vector<8xf32> to vector<8x1xf32>
      %25 = tpu.reciprocal %24 {approx = true} : vector<8x1xf32> -> vector<8x1xf32>
      %26 = vector.broadcast %25 : vector<8x1xf32> to vector<8x128xf32>
      %27 = arith.mulf %22, %26 : vector<8x128xf32>
      %c0_15 = arith.constant 0 : index
      %c0_16 = arith.constant 0 : index
      %28 = vector.load %arg5[%c0_15, %c0_16] : memref<8x128xf32, #tpu.memory_space<vmem>>, vector<8x128xf32>
      tpu.vector_store %arg5[%c0_15, %c0_16], %27 {strides = array<i32>} : memref<8x128xf32, #tpu.memory_space<vmem>>, vector<8x128xf32>,
    } else {
    }
    return
  }
  func.func @transform_0(%arg0: i32, %arg1: i32) -> (i32, i32) {
    %c0_i32 = arith.constant 0 : i32
    return %arg0, %arg1 : i32, i32
  }
  func.func @transform_1(%arg0: i32, %arg1: i32) -> (i32, i32) {
    %c0_i32 = arith.constant 0 : i32
    %c0_i32_0 = arith.constant 0 : i32
    return %arg1, %c0_i32 : i32, i32
  }
  func.func @transform_2(%arg0: i32, %arg1: i32) -> (i32, i32) {
    %c0_i32 = arith.constant 0 : i32
    %c0_i32_0 = arith.constant 0 : i32
    %c0_i32_1 = arith.constant 0 : i32
    return %c0_i32, %c0_i32_0 : i32, i32
  }
  func.func @transform_3(%arg0: i32, %arg1: i32) -> (i32, i32) {
    %c0_i32 = arith.constant 0 : i32
    %c0_i32_0 = arith.constant 0 : i32
    return %arg0, %c0_i32 : i32, i32
  }
}

</mosaic_0001>

<llo_original>
// kernel: tpu_custom_call.1
$region0: #{tpu_custom_call.1}
  #allocation0 [shape = 'u32[]', space=smem, size = 0x4, offset = 0x4, fixed_abs, tag = 'smem constant byte address 0x4 - core index']
  #allocation1 [shape = 'u32[144,128]{1,0:T(1,128)}', space=vmem, size = 0x12000, scoped, tag = 'internal scratch']
  %s0 = inlined_call_operand.hbm [shape: bf16[8,128], index: 0, kind: input, shape index: {}]
  %s1 = inlined_call_operand.hbm [shape: bf16[128,128], index: 1, kind: input, shape index: {}]
  %s2 = inlined_call_operand.vmem [shape: f32[1,128], index: 2, kind: input, shape index: {}]
  %s3 = inlined_call_operand.hbm [shape: f32[8,128], index: 3, kind: output, shape index: {}]
  %s4 = sld [smem:[#allocation0]]
  $region38: #{tpu_custom_call.1} parent=0
    _
  %s6 = ssub.s32 1, %s4
  %s7 = scalar_select 0, %s6, %s4
  $region1: #{tpu_custom_call.1} parent=0
    #allocation2 [shape = 'u8[2048]{0}', space=vmem, size = 0x800, scoped, tag = 'input window, operand 0, single buffered']
    #allocation3 [shape = 's32[1]{0}', space=sflag, size = 0x4, scoped, tag = 'scoped memory for tpu_custom_call.1']
    #allocation4 [shape = 's32[1]{0}', space=sflag, size = 0x4, scoped, tag = 'scoped memory for tpu_custom_call.1']
    #allocation5 [shape = 'u8[32768]{0}', space=vmem, size = 0x8000, scoped, tag = 'input window, operand 1, single buffered']
    #allocation6 [shape = 's32[1]{0}', space=sflag, size = 0x4, scoped, tag = 'scoped memory for tpu_custom_call.1']
    #allocation7 [shape = 'u8[4096]{0}', space=vmem, size = 0x1000, scoped, tag = 'output window, operand 0, single buffered']
    %8 = vsyncpa [#allocation3], 0
    %9 = vsyncpa [#allocation6], 0
    %10 = vsyncpa [#allocation4], 0
    // Predicated region
    $region2: #{tpu_custom_call.1} parent=1 // pred_check
      _
    $region3: #{tpu_custom_call.1} parent=1 // pred_check_branch
      %12 = sbr.rel (0) target = $region5
    $region4: #{tpu_custom_call.1} parent=1 // pred_region
      %s14 = ssub.s32 64, 64
      %15 = vsyncadd [#allocation3], %s14
      %s17 = sshll.u32 [#allocation2], 4
      %s18 = int_to_ptr.vmem [resolvable:$true] %s17
      %20 = dma.hbm_to_vmem [thread:$0]  %s0, 64, %s18, [#allocation3]
    $region5: #{tpu_custom_call.1} parent=1 // pred_fallthru
      _
    // Predicated region
    $region6: #{tpu_custom_call.1} parent=1 // pred_check
      _
    $region7: #{tpu_custom_call.1} parent=1 // pred_check_branch
      %22 = sbr.rel (0) target = $region9
    $region8: #{tpu_custom_call.1} parent=1 // pred_region
      %s24 = ssub.s32 1024, 1024
      %25 = vsyncadd [#allocation6], %s24
      %s26 = sshll.u32 [#allocation5], 4
      %s27 = int_to_ptr.vmem [resolvable:$true] %s26
      %32 = dma.hbm_to_vmem [thread:$0]  %s1, 1024, %s27, [#allocation6], 64, 64, 4
    $region9: #{tpu_custom_call.1} parent=1 // pred_fallthru
      _
    // Predicated region
    $region10: #{tpu_custom_call.1} parent=1 // pred_check
      _
    $region11: #{tpu_custom_call.1} parent=1 // pred_check_branch
      %34 = sbr.rel (0) target = $region13
    $region12: #{tpu_custom_call.1} parent=1 // pred_region
      _
    $region13: #{tpu_custom_call.1} parent=1 // pred_fallthru
      _
    // Predicated region
    $region14: #{tpu_custom_call.1} parent=1 // pred_check
      _
    $region15: #{tpu_custom_call.1} parent=1 // pred_check_branch
      %36 = sbr.rel (0) target = $region17
    $region16: #{tpu_custom_call.1} parent=1 // pred_region
      %37 = dma.done [#allocation3], 64
    $region17: #{tpu_custom_call.1} parent=1 // pred_fallthru
      _
    // Predicated region
    $region18: #{tpu_custom_call.1} parent=1 // pred_check
      _
    $region19: #{tpu_custom_call.1} parent=1 // pred_check_branch
      %39 = sbr.rel (0) target = $region21
    $region20: #{tpu_custom_call.1} parent=1 // pred_region
      %40 = dma.done [#allocation6], 1024
    $region21: #{tpu_custom_call.1} parent=1 // pred_fallthru
      _
    %p42 = scmp.eq.s32.totalorder 0, 0
    // Predicated region
    $region22: #{tpu_custom_call.1} parent=1 // pred_check
      %p43 = pneg %p42
    $region23: #{tpu_custom_call.1} parent=1 // pred_check_branch
      %45 = sbr.rel (%p43) target = $region25
    $region24: #{tpu_custom_call.1} parent=1 // pred_region
      %v46 = vld [vmem:[%s2] sm:$0x1]
      %v48 = vlaneseq
      %v49 = vshrl.u32 %v48, 7
      %v50 = vsub.s32 0, %v49
      %v51 = vrot.slane %v46, %v50
      %53 = vst [vmem:[#allocation7] sm:$0xff] %v51
    $region25: #{tpu_custom_call.1} parent=1 // pred_fallthru
      _
    %v54 = vld [vmem:[#allocation7] sm:$0xff]
    %v55 = vld [vmem:[#allocation2] sm:$0xf]
    %v56 = vld [vmem:[#allocation5] sm:$0xf]
    %v57 = vld [vmem:[#allocation5 + $0x4] sm:$0xf]
    %v58 = vld [vmem:[#allocation5 + $0x8] sm:$0xf]
    %v59 = vld [vmem:[#allocation5 + $0xc] sm:$0xf]
    %v60 = vld [vmem:[#allocation5 + $0x10] sm:$0xf]
    %v61 = vld [vmem:[#allocation5 + $0x14] sm:$0xf]
    %v62 = vld [vmem:[#allocation5 + $0x18] sm:$0xf]
    %v63 = vld [vmem:[#allocation5 + $0x1c] sm:$0xf]
    %v64 = vld [vmem:[#allocation5 + $0x20] sm:$0xf]
    %v65 = vld [vmem:[#allocation5 + $0x24] sm:$0xf]
    %v66 = vld [vmem:[#allocation5 + $0x28] sm:$0xf]
    %v67 = vld [vmem:[#allocation5 + $0x2c] sm:$0xf]
    %v68 = vld [vmem:[#allocation5 + $0x30] sm:$0xf]
    %v69 = vld [vmem:[#allocation5 + $0x34] sm:$0xf]
    %v70 = vld [vmem:[#allocation5 + $0x38] sm:$0xf]
    %v71 = vld [vmem:[#allocation5 + $0x3c] sm:$0xf]
    %v88 = vunpack.c.l.b16 %v56
    %v89 = vunpack.c.l.b16 %v57
    %v90 = vunpack.c.l.b16 %v58
    %v91 = vunpack.c.l.b16 %v59
    %v92 = vunpack.c.l.b16 %v60
    %v93 = vunpack.c.l.b16 %v61
    %v94 = vunpack.c.l.b16 %v62
    %v95 = vunpack.c.l.b16 %v63
    %v96 = vunpack.c.l.b16 %v64
    %v97 = vunpack.c.l.b16 %v65
    %v98 = vunpack.c.l.b16 %v66
    %v99 = vunpack.c.l.b16 %v67
    %v100 = vunpack.c.l.b16 %v68
    %v101 = vunpack.c.l.b16 %v69
    %v102 = vunpack.c.l.b16 %v70
    %v103 = vunpack.c.l.b16 %v71
    %v104 = vpack.c.b16 %v89, %v88
    %v105 = vpack.c.b16 %v91, %v90
    %v106 = vpack.c.b16 %v93, %v92
    %v107 = vpack.c.b16 %v95, %v94
    %v108 = vpack.c.b16 %v97, %v96
    %v109 = vpack.c.b16 %v99, %v98
    %v110 = vpack.c.b16 %v101, %v100
    %v111 = vpack.c.b16 %v103, %v102
    %120 = vmatprep.subr.bf16.mxu0 0
    %121 = vmatpush1.bf16.msra.mxu0 %v104
    %122 = vmatprep.subr.bf16.mxu0 0
    %123 = vmatpush1.bf16.msra.mxu0 %v105
    %124 = vmatprep.subr.bf16.mxu0 0
    %125 = vmatpush1.bf16.msra.mxu0 %v106
    %126 = vmatprep.subr.bf16.mxu0 0
    %127 = vmatpush1.bf16.msra.mxu0 %v107
    %128 = vmatprep.subr.bf16.mxu0 0
    %129 = vmatpush1.bf16.msra.mxu0 %v108
    %130 = vmatprep.subr.bf16.mxu0 0
    %131 = vmatpush1.bf16.msra.mxu0 %v109
    %132 = vmatprep.subr.bf16.mxu0 0
    %133 = vmatpush1.bf16.msra.mxu0 %v110
    %134 = vmatprep.subr.bf16.mxu0 0
    %135 = vmatpush1.bf16.msra.mxu0 %v111
    %136 = vmatprep.subr.bf16.mxu0 0
    %137 = vmatpush1.bf16.msra.mxu0 0
    %138 = vmatprep.subr.bf16.mxu0 0
    %139 = vmatpush1.bf16.msra.mxu0 0
    %140 = vmatprep.subr.bf16.mxu0 0
    %141 = vmatpush1.bf16.msra.mxu0 0
    %142 = vmatprep.subr.bf16.mxu0 0
    %143 = vmatpush1.bf16.msra.mxu0 0
    %144 = vmatprep.subr.bf16.mxu0 0
    %145 = vmatpush1.bf16.msra.mxu0 0
    %146 = vmatprep.subr.bf16.mxu0 0
    %147 = vmatpush1.bf16.msra.mxu0 0
    %148 = vmatprep.subr.bf16.mxu0 0
    %149 = vmatpush1.bf16.msra.mxu0 0
    %150 = vmatprep.subr.bf16.mxu0 0
    %151 = vmatpush1.bf16.msra.mxu0 0
    %152 = vmatprep.mubr.bf16.mxu0 0
    %153 = vmatmul.mubr.bf16.gmra.mrb[0].mxu0 %v55
    %v154 = vpop.f32.mrb[0].mxu0
    %v155 = vadd.f32 0.0, %v154
    %v156 = vpop.f32.mrb[0].mxu0
    %v157 = vpop.f32.mrb[0].mxu0
    %v158 = vpop.f32.mrb[0].mxu0
    %159 = vdwg.mxu0
    %v160 = vadd.f32 %v54, %v155
    %161 = vst [vmem:[#allocation7] sm:$0xff] %v160
    // Predicated region
    $region26: #{tpu_custom_call.1} parent=1 // pred_check
      %p162 = pneg %p42
    $region27: #{tpu_custom_call.1} parent=1 // pred_check_branch
      %164 = sbr.rel (%p162) target = $region29
    $region28: #{tpu_custom_call.1} parent=1 // pred_region
      %v165 = vld [vmem:[#allocation7] sm:$0xff]
      %v166 = vlaneseq
      %v167 = vand.u32 %v166, 127
      %vm168 = vcmp.lt.s32.totalorder %v167, 16
      %v169 = vsel %vm168, %v165, -inf
      %170 = vmax.xlane.f32.xlu0 %v169
      %v171 = vpop.xlane.xlu0 %170
      %v172 = vsub.f32 %v169, %v171
      %v173 = vmul.f32 %v172, 1.442695
      %v174 = vpow.pop %v173
      %175 = vadd.xlane.f32.xlu0 %v174
      %v176 = vpop.xlane.xlu0 %175
      %v177 = vrcp.pop %v176
      %v178 = vmul.f32 %v174, %v177
      %179 = vst [vmem:[#allocation7] sm:$0xff] %v178
    $region29: #{tpu_custom_call.1} parent=1 // pred_fallthru
      _
    // Predicated region
    $region30: #{tpu_custom_call.1} parent=1 // pred_check
      _
    $region31: #{tpu_custom_call.1} parent=1 // pred_check_branch
      %181 = sbr.rel (0) target = $region33
    $region32: #{tpu_custom_call.1} parent=1 // pred_region
      %s183 = ssub.s32 128, 128
      %184 = vsyncadd [#allocation4], %s183
      %s186 = sshll.u32 [#allocation7], 4
      %s187 = int_to_ptr.vmem [resolvable:$true] %s186
      %189 = dma.vmem_to_hbm [thread:$0]  %s187, 128, %s3, [#allocation4]
    $region33: #{tpu_custom_call.1} parent=1 // pred_fallthru
      _
    // Predicated region
    $region34: #{tpu_custom_call.1} parent=1 // pred_check
      _
    $region35: #{tpu_custom_call.1} parent=1 // pred_check_branch
      %191 = sbr.rel (0) target = $region37
    $region36: #{tpu_custom_call.1} parent=1 // pred_region
      %192 = dma.done [#allocation4], 128
    $region37: #{tpu_custom_call.1} parent=1 // pred_fallthru
      _
    %193 = vsyncpa [#allocation3], 1
    %194 = vsyncpa [#allocation6], 1
    %195 = vsyncpa [#allocation4], 1

</llo_original>
